<compile_context>
chip_gen: v5e
topology: v5e:2x2
jax: 0.10.0
libtpu: 0.0.40
codegen_flags: <defaults>
</compile_context>

<pallas_src>
import jax
import jax.numpy as jnp
from jax.experimental import pallas as pl
from jax.experimental.pallas import tpu as pltpu

_LANE = 128


def _fuse_kernel(x_ref, w_ref, shift_ref, o_ref):
    # x_ref:     (BN, C_in, TL)  current (batch-block, L-tile)
    # w_ref:     (C_out, C_in)   conv weight with BN scale folded in (resident)
    # shift_ref: (C_out, 1)      folded conv-bias + BN shift (resident)
    # o_ref:     (BN, C_out, TL)
    w = w_ref[...]
    shift = shift_ref[...]
    c_out, c_in = w.shape
    bn, _, tl = x_ref.shape

    use_vpu = c_in <= 4
    if use_vpu:
        # Hoist the lane-broadcast weight columns once (not per FMA / batch).
        w_cols = [jnp.broadcast_to(w[:, c:c + 1], (c_out, tl))
                  for c in range(c_in)]

    for bi in range(bn):                      # static unroll, BN is small
        x = x_ref[bi]                         # (C_in, TL)
        if use_vpu:
            # Tiny contraction: C_in broadcast FMAs on the VPU.  A (8 x 4)
            # matmul would leave the MXU idle and pay fill/drain per step.
            y = w_cols[0] * x[0:1, :]
            for c in range(1, c_in):
                y = y + w_cols[c] * x[c:c + 1, :]
        else:
            y = jnp.dot(w, x, preferred_element_type=jnp.float32)

        y = y + shift                         # conv bias + BN (eval) shift
        # h_swish: y * relu6(y + 3) / 6
        y = y * jnp.clip(y + 3.0, 0.0, 6.0) * (1.0 / 6.0)
        o_ref[bi] = y.astype(o_ref.dtype)


def _vmem_capacity_bytes():
    try:
        info = pltpu.get_tpu_info()
        cap = getattr(info, "vmem_capacity_bytes", None)
        if cap:
            return int(cap)
    except Exception:
        pass
    return 64 * 1024 * 1024  # conservative default (v7x per-TC VMEM)


def _largest_divisor_leq(n, cap):
    cap = max(1, min(n, cap))
    for d in range(cap, 0, -1):
        if n % d == 0:
            return d
    return 1


def channel_fuse_pallas(x, w, b, gamma, beta, running_mean, running_var,
                        eps=1e-5):
    """x: (N, C_in, L) float32.  Returns (N, C_out, L) float32."""
    N, C_in, L = x.shape
    C_out = w.shape[0]
    w = w.reshape(C_out, C_in)                  # accept (C_out,C_in[,1])

    # Fold eval-mode BatchNorm into the conv weight (scale) and a shift.
    inv_std = 1.0 / jnp.sqrt(running_var + eps)                 # (C_out,)
    scale = gamma * inv_std                                     # (C_out,)
    w_folded = (w * scale[:, None]).astype(jnp.float32)         # (C_out, C_in)
    shift = ((b - running_mean) * scale + beta).reshape(C_out, 1)
    shift = shift.astype(jnp.float32)

    # ---- Generation-aware VMEM budget ------------------------------------
    vmem_cap = _vmem_capacity_bytes()
    if vmem_cap <= 64 * 1024 * 1024:
        # v7x: 64 MiB/TC -> conservative tile budget, but keep tiles large
        # (needed to amortize step overhead against ~3.2 TB/s HBM).
        tile_budget, vmem_limit = 24 * 1024 * 1024, 48 * 1024 * 1024
    else:
        # v5e / v6e: 128 MiB -> spend more VMEM on big tiles.
        tile_budget, vmem_limit = 56 * 1024 * 1024, 96 * 1024 * 1024

    resident = 2 * (C_out * C_in + C_out) * 4      # W + shift (double-buffered)
    scratch_reserve = 2 * 1024 * 1024              # compiler internal scratch
    col_bytes = 2 * (C_in + C_out) * 4             # dbl-buffered x + out, f32
    tile_budget = max(_LANE * col_bytes,
                      tile_budget - resident - scratch_reserve)

    # ---- Lane-dense L tiling (no wrapper-side pad / slice) ----------------
    tl_cap = max(_LANE, (tile_budget // col_bytes) // _LANE * _LANE)
    if L < _LANE:
        TL = L                                     # full-dim block (no padding)
    else:
        TL = min(tl_cap, (L // _LANE) * _LANE)     # multiple of 128, <= L

    # v7x megacore: guarantee >= 2 grid steps when N == 1.
    if N == 1 and pl.cdiv(L, TL) == 1 and L >= 2 * _LANE:
        TL = pl.cdiv(L // _LANE, 2) * _LANE

    # ---- Batch blocking for short-L / large-N workloads -------------------
    step_bytes = TL * (C_in + C_out) * 4
    target_step_bytes = 4 * 1024 * 1024
    BN = 1
    if N > 1 and step_bytes < target_step_bytes:
        want = min(N, max(1, target_step_bytes // max(step_bytes, 1)))
        want = min(want, max(1, tile_budget // max(2 * step_bytes, 1)))
        if pl.cdiv(L, TL) == 1:
            want = min(want, max(1, N // 2))       # keep >= 2 grid steps
        want = min(want, 8)                        # bound static unroll
        BN = _largest_divisor_leq(N, want)

    grid = (N // BN, pl.cdiv(L, TL))

    grid_spec = pltpu.PrefetchScalarGridSpec(
        num_scalar_prefetch=0,
        grid=grid,
        in_specs=[
            pl.BlockSpec((BN, C_in, TL), lambda n, l: (n, 0, l)),
            # Constant block index -> W / shift stay resident in VMEM.
            pl.BlockSpec((C_out, C_in), lambda n, l: (0, 0)),
            pl.BlockSpec((C_out, 1), lambda n, l: (0, 0)),
        ],
        out_specs=pl.BlockSpec((BN, C_out, TL), lambda n, l: (n, 0, l)),
    )

    cost = pl.CostEstimate(
        flops=2 * N * L * C_in * C_out,
        transcendentals=0,
        bytes_accessed=4 * (N * C_in * L + N * C_out * L
                            + C_out * C_in + C_out),
    )

    out = pl.pallas_call(
        _fuse_kernel,
        out_shape=jax.ShapeDtypeStruct((N, C_out, L), jnp.float32),
        grid_spec=grid_spec,
        compiler_params=pltpu.CompilerParams(
            # Both axes independent (no reduction) -> megacore sharding.
            dimension_semantics=("parallel", "parallel"),
            vmem_limit_bytes=vmem_limit,
        ),
        cost_estimate=cost,
    )(x.astype(jnp.float32), w_folded, shift)

    return out


def channel_fuse_ref(x, w, b, gamma, beta, running_mean, running_var,
                     eps=1e-5):
    """Pure-JAX reference (Conv1d k=1 -> eval BN1d -> h_swish)."""
    y = jnp.einsum("oc,ncl->nol", w, x) + b[None, :, None]
    y = (y - running_mean[None, :, None]) / jnp.sqrt(
        running_var[None, :, None] + eps)
    y = y * gamma[None, :, None] + beta[None, :, None]
    return y * jnp.clip(y + 3.0, 0.0, 6.0) / 6.0


if __name__ == "__main__":
    key = jax.random.PRNGKey(0)
    k_x, k_w, k_b, k_g, k_be, k_m, k_v = jax.random.split(key, 7)

    N, C_in, L = 2, 4, 16        # batch, in_chan, sequence length
    C_out = 8                    # num_feature

    x = jax.random.normal(k_x, (N, C_in, L), dtype=jnp.float32)

    # Deterministic parameter init (Conv1d weight/bias, BN params & stats).
    w = jax.random.normal(k_w, (C_out, C_in), dtype=jnp.float32) * 0.1
    b = jax.random.normal(k_b, (C_out,), dtype=jnp.float32) * 0.1
    gamma = 1.0 + 0.1 * jax.random.normal(k_g, (C_out,), dtype=jnp.float32)
    beta = 0.1 * jax.random.normal(k_be, (C_out,), dtype=jnp.float32)
    running_mean = 0.1 * jax.random.normal(k_m, (C_out,), dtype=jnp.float32)
    running_var = jnp.abs(
        1.0 + 0.1 * jax.random.normal(k_v, (C_out,), dtype=jnp.float32))

    out = channel_fuse_pallas(x, w, b, gamma, beta, running_mean, running_var)
    out = jax.block_until_ready(out)

    ref = channel_fuse_ref(x, w, b, gamma, beta, running_mean, running_var)
    assert out.shape == (N, C_out, L)
    assert jnp.allclose(out, ref, atol=1e-5, rtol=1e-5)

    print("KERNEL_OK")
</pallas_src>

<mosaic_0001>
module attributes {stable_mosaic.version = 11 : i64} {
  func.func @_fuse_kernel(%arg0: i32, %arg1: i32, %arg2: memref<1x4x16xf32, #tpu.memory_space<vmem>>, %arg3: memref<8x4xf32, #tpu.memory_space<vmem>>, %arg4: memref<8x1xf32, #tpu.memory_space<vmem>>, %arg5: memref<1x8x16xf32, #tpu.memory_space<vmem>>) attributes {dimension_semantics = [#tpu.dimension_semantics<parallel>, #tpu.dimension_semantics<parallel>], iteration_bounds = array<i64: 2, 1>, scalar_prefetch = 0 : i64, scratch_operands = 0 : i64, tpu.core_type = #tpu.core_type<tc>, window_params = [{transform_indices = @transform_0, window_bounds = array<i64: 1, 4, 16>}, {pipeline_mode = #tpu.pipeline_mode<synchronous>, transform_indices = @transform_1, window_bounds = array<i64: 8, 4>}, {pipeline_mode = #tpu.pipeline_mode<synchronous>, transform_indices = @transform_2, window_bounds = array<i64: 8, 1>}, {transform_indices = @transform_3, window_bounds = array<i64: 1, 8, 16>}]} {
    %c0 = arith.constant 0 : index
    %c0_0 = arith.constant 0 : index
    %0 = vector.load %arg3[%c0, %c0_0] : memref<8x4xf32, #tpu.memory_space<vmem>>, vector<8x4xf32>
    %c0_1 = arith.constant 0 : index
    %c0_2 = arith.constant 0 : index
    %1 = vector.load %arg4[%c0_1, %c0_2] : memref<8x1xf32, #tpu.memory_space<vmem>>, vector<8x1xf32>
    %2 = vector.extract_strided_slice %0 {offsets = [0, 0], sizes = [8, 1], strides = [1, 1]} : vector<8x4xf32> to vector<8x1xf32>
    %3 = vector.shape_cast %2 : vector<8x1xf32> to vector<8x1xf32>
    %4 = vector.broadcast %3 : vector<8x1xf32> to vector<8x16xf32>
    %5 = vector.extract_strided_slice %0 {offsets = [0, 1], sizes = [8, 1], strides = [1, 1]} : vector<8x4xf32> to vector<8x1xf32>
    %6 = vector.shape_cast %5 : vector<8x1xf32> to vector<8x1xf32>
    %7 = vector.broadcast %6 : vector<8x1xf32> to vector<8x16xf32>
    %8 = vector.extract_strided_slice %0 {offsets = [0, 2], sizes = [8, 1], strides = [1, 1]} : vector<8x4xf32> to vector<8x1xf32>
    %9 = vector.shape_cast %8 : vector<8x1xf32> to vector<8x1xf32>
    %10 = vector.broadcast %9 : vector<8x1xf32> to vector<8x16xf32>
    %11 = vector.extract_strided_slice %0 {offsets = [0, 3], sizes = [8, 1], strides = [1, 1]} : vector<8x4xf32> to vector<8x1xf32>
    %12 = vector.shape_cast %11 : vector<8x1xf32> to vector<8x1xf32>
    %13 = vector.broadcast %12 : vector<8x1xf32> to vector<8x16xf32>
    %c0_3 = arith.constant 0 : index
    %c0_4 = arith.constant 0 : index
    %c0_5 = arith.constant 0 : index
    %14 = vector.load %arg2[%c0_3, %c0_4, %c0_5] : memref<1x4x16xf32, #tpu.memory_space<vmem>>, vector<1x4x16xf32>
    %15 = vector.shape_cast %14 : vector<1x4x16xf32> to vector<4x16xf32>
    %16 = vector.extract_strided_slice %15 {offsets = [0, 0], sizes = [1, 16], strides = [1, 1]} : vector<4x16xf32> to vector<1x16xf32>
    %17 = vector.broadcast %16 : vector<1x16xf32> to vector<8x16xf32>
    %18 = arith.mulf %4, %17 : vector<8x16xf32>
    %19 = vector.extract_strided_slice %15 {offsets = [1, 0], sizes = [1, 16], strides = [1, 1]} : vector<4x16xf32> to vector<1x16xf32>
    %20 = vector.broadcast %19 : vector<1x16xf32> to vector<8x16xf32>
    %21 = arith.mulf %7, %20 : vector<8x16xf32>
    %22 = arith.addf %18, %21 : vector<8x16xf32>
    %23 = vector.extract_strided_slice %15 {offsets = [2, 0], sizes = [1, 16], strides = [1, 1]} : vector<4x16xf32> to vector<1x16xf32>
    %24 = vector.broadcast %23 : vector<1x16xf32> to vector<8x16xf32>
    %25 = arith.mulf %10, %24 : vector<8x16xf32>
    %26 = arith.addf %22, %25 : vector<8x16xf32>
    %27 = vector.extract_strided_slice %15 {offsets = [3, 0], sizes = [1, 16], strides = [1, 1]} : vector<4x16xf32> to vector<1x16xf32>
    %28 = vector.broadcast %27 : vector<1x16xf32> to vector<8x16xf32>
    %29 = arith.mulf %13, %28 : vector<8x16xf32>
    %30 = arith.addf %26, %29 : vector<8x16xf32>
    %31 = vector.broadcast %1 : vector<8x1xf32> to vector<8x16xf32>
    %32 = arith.addf %30, %31 : vector<8x16xf32>
    %cst = arith.constant 3.000000e+00 : f32
    %33 = vector.broadcast %cst : f32 to vector<8x16xf32>
    %34 = arith.addf %32, %33 : vector<8x16xf32>
    %cst_6 = arith.constant 0.000000e+00 : f32
    %cst_7 = arith.constant 6.000000e+00 : f32
    %35 = vector.broadcast %cst_6 : f32 to vector<8x16xf32>
    %36 = arith.maximumf %35, %34 : vector<8x16xf32>
    %37 = vector.broadcast %cst_7 : f32 to vector<8x16xf32>
    %38 = arith.minimumf %37, %36 : vector<8x16xf32>
    %39 = arith.mulf %32, %38 : vector<8x16xf32>
    %cst_8 = arith.constant 0.166666672 : f32
    %40 = vector.broadcast %cst_8 : f32 to vector<8x16xf32>
    %41 = arith.mulf %39, %40 : vector<8x16xf32>
    %c0_9 = arith.constant 0 : index
    %c0_10 = arith.constant 0 : index
    %c0_11 = arith.constant 0 : index
    %42 = vector.load %arg5[%c0_9, %c0_10, %c0_11] : memref<1x8x16xf32, #tpu.memory_space<vmem>>, vector<1x8x16xf32>
    %43 = vector.shape_cast %42 : vector<1x8x16xf32> to vector<8x16xf32>
    %44 = vector.shape_cast %41 : vector<8x16xf32> to vector<1x8x16xf32>
    tpu.vector_store %arg5[%c0_9, %c0_10, %c0_11], %44 {strides = array<i32>} : memref<1x8x16xf32, #tpu.memory_space<vmem>>, vector<1x8x16xf32>,
    return
  }
  func.func @transform_0(%arg0: i32, %arg1: i32) -> (i32, i32, i32) {
    %c0_i32 = arith.constant 0 : i32
    %c0_i32_0 = arith.constant 0 : i32
    return %arg0, %c0_i32, %arg1 : i32, i32, i32
  }
  func.func @transform_1(%arg0: i32, %arg1: i32) -> (i32, i32) {
    %c0_i32 = arith.constant 0 : i32
    %c0_i32_0 = arith.constant 0 : i32
    %c0_i32_1 = arith.constant 0 : i32
    return %c0_i32, %c0_i32_0 : i32, i32
  }
  func.func @transform_2(%arg0: i32, %arg1: i32) -> (i32, i32) {
    %c0_i32 = arith.constant 0 : i32
    %c0_i32_0 = arith.constant 0 : i32
    %c0_i32_1 = arith.constant 0 : i32
    return %c0_i32, %c0_i32_0 : i32, i32
  }
  func.func @transform_3(%arg0: i32, %arg1: i32) -> (i32, i32, i32) {
    %c0_i32 = arith.constant 0 : i32
    %c0_i32_0 = arith.constant 0 : i32
    return %arg0, %c0_i32, %arg1 : i32, i32, i32
  }
}

</mosaic_0001>

<llo_original>
// kernel: tpu_custom_call.1
$region0: #{tpu_custom_call.1}
  #allocation0 [shape = 'u32[]', space=smem, size = 0x4, offset = 0x4, fixed_abs, tag = 'smem constant byte address 0x4 - core index']
  #allocation1 [shape = 'u32[72,128]{1,0:T(1,128)}', space=vmem, size = 0x9000, scoped, tag = 'internal scratch']
  %s0 = inlined_call_operand.vmem [shape: f32[2,4,16], index: 0, kind: input, shape index: {}]
  %s1 = inlined_call_operand.vmem [shape: f32[8,4], index: 1, kind: input, shape index: {}]
  %s2 = inlined_call_operand.vmem [shape: f32[8,1], index: 2, kind: input, shape index: {}]
  %s3 = inlined_call_operand.hbm [shape: f32[2,8,16], index: 3, kind: output, shape index: {}]
  %s4 = sld [smem:[#allocation0]]
  $region45: #{tpu_custom_call.1} parent=0
    _
  %s6 = ssub.s32 1, %s4
  %s7 = scalar_select 0, %s6, %s4
  $region1: #{tpu_custom_call.1} parent=0
    #allocation2 [shape = 'u8[8192]{0}', space=vmem, size = 0x2000, scoped, tag = 'output window, operand 0']
    #allocation3 [shape = 's32[2]{0}', space=sflag, size = 0x8, scoped, tag = 'scoped memory for tpu_custom_call.1']
    %8 = vsyncpa [#allocation3], 0
    %s9 = scalar_lea.sflag [#allocation3], 1
    %10 = vsyncpa %s9, 0
    loop: start=0, step=1, limit=4
    $region2: #{tpu_custom_call.1} parent=1 // loop_pre_header
      _
    $region3: #{tpu_custom_call.1} parent=1 // loop_header
      %s12 = sphi 0, %s16
      %p13 = scmp.ge.s32.totalorder %s12, 4
      %s19 = sphi 0, %s31
      %s20 = sphi 0, %s27
      %s21 = sphi 0, %s19
      %s22 = sphi 0, %s20
      %s23 = sphi 0, %s21
      %s24 = sphi 0, %s22
      %s36 = sphi 0, %s38
      %s39 = sphi 0, %s36
      %s40 = sphi 0, %s39
      %s56 = sphi 0, %s40
      %s60 = sphi 0, %s60
      %s62 = sphi 0, %s60
      %s63 = sphi 0, %s62
      %s77 = sphi 0, %s63
      %s81 = sphi 0, %s81
      %s83 = sphi 0, %s81
      %s84 = sphi 0, %s83
      %s98 = sphi 0, %s84
      %s106 = sphi 0, %s108
      %s109 = sphi 0, %s106
      %s110 = sphi 0, %s109
      %s126 = sphi 0, %s110
    $region4: #{tpu_custom_call.1} parent=1 // loop_header_branch
      %15 = sbr.rel (%p13) target = $region8
    $region5: #{tpu_custom_call.1} parent=1 // loop_body
      %s17 = ssub.s32 %s12, 1
      %s18 = ssub.s32 %s12, 2
      %s25 = sadd.s32 1, %s20
      %p26 = scmp.ge.s32.totalorder %s25, 1
      %s27 = scalar_select %p26, 0, %s25
      %s28 = sadd.s32 1, %s19
      %s29 = scalar_select %p26, %s28, %s19
      %p30 = scmp.ge.s32.totalorder %s29, 2
      %s31 = scalar_select %p30, 0, %s29
      %s32 = ssub.s32 %s19, %s31
      %s33 = ssub.s32 %s20, %s27
      %s34 = sor.u32 %s32, %s33
      %p35 = scmp.eq.s32.totalorder %s34, 0
      %s37 = sadd.s32 %s36, 1
      %s38 = scalar_select %p35, %s36, %s37
      %p41 = pneg %p35
      %p42 = scmp.eq.s32.totalorder %s12, 1
      %p43 = por %p41, %p42
      %p44 = scmp.ne.s32.totalorder %s36, %s39
      %p45 = scmp.eq.s32.totalorder %s12, 0
      %p46 = por %p44, %p45
      %p47 = scmp.ne.s32.totalorder %s36, %s39
      %p48 = scmp.eq.s32.totalorder %s17, 1
      %p49 = por %p47, %p48
      %p50 = scmp.ne.s32.totalorder %s39, %s40
      %p51 = scmp.eq.s32.totalorder %s17, 0
      %p52 = por %p50, %p51
      %p53 = scmp.ne.s32.totalorder %s39, %s40
      %p54 = scmp.eq.s32.totalorder %s18, 1
      %p55 = por %p53, %p54
      %p57 = scmp.ne.s32.totalorder %s40, %s56
      %p58 = scmp.eq.s32.totalorder %s18, 0
      %p59 = por %p57, %p58
      %s61 = sadd.s32 %s60, 1
      %p64 = scmp.eq.s32.totalorder %s12, 1
      %p65 = scmp.ne.s32.totalorder %s60, %s62
      %p66 = scmp.eq.s32.totalorder %s12, 0
      %p67 = por %p65, %p66
      %p68 = scmp.ne.s32.totalorder %s60, %s62
      %p69 = scmp.eq.s32.totalorder %s17, 1
      %p70 = por %p68, %p69
      %p71 = scmp.ne.s32.totalorder %s62, %s63
      %p72 = scmp.eq.s32.totalorder %s17, 0
      %p73 = por %p71, %p72
      %p74 = scmp.ne.s32.totalorder %s62, %s63
      %p75 = scmp.eq.s32.totalorder %s18, 1
      %p76 = por %p74, %p75
      %p78 = scmp.ne.s32.totalorder %s63, %s77
      %p79 = scmp.eq.s32.totalorder %s18, 0
      %p80 = por %p78, %p79
      %s82 = sadd.s32 %s81, 1
      %p85 = scmp.eq.s32.totalorder %s12, 1
      %p86 = scmp.ne.s32.totalorder %s81, %s83
      %p87 = scmp.eq.s32.totalorder %s12, 0
      %p88 = por %p86, %p87
      %p89 = scmp.ne.s32.totalorder %s81, %s83
      %p90 = scmp.eq.s32.totalorder %s17, 1
      %p91 = por %p89, %p90
      %p92 = scmp.ne.s32.totalorder %s83, %s84
      %p93 = scmp.eq.s32.totalorder %s17, 0
      %p94 = por %p92, %p93
      %p95 = scmp.ne.s32.totalorder %s83, %s84
      %p96 = scmp.eq.s32.totalorder %s18, 1
      %p97 = por %p95, %p96
      %p99 = scmp.ne.s32.totalorder %s84, %s98
      %p100 = scmp.eq.s32.totalorder %s18, 0
      %p101 = por %p99, %p100
      %s102 = ssub.s32 %s19, %s31
      %s103 = ssub.s32 %s20, %s27
      %s104 = sor.u32 %s102, %s103
      %p105 = scmp.eq.s32.totalorder %s104, 0
      %s107 = sadd.s32 %s106, 1
      %s108 = scalar_select %p105, %s106, %s107
      %p111 = pneg %p105
      %p112 = scmp.eq.s32.totalorder %s12, 1
      %p113 = por %p111, %p112
      %p114 = scmp.ne.s32.totalorder %s106, %s109
      %p115 = scmp.eq.s32.totalorder %s12, 0
      %p116 = por %p114, %p115
      %p117 = scmp.ne.s32.totalorder %s106, %s109
      %p118 = scmp.eq.s32.totalorder %s17, 1
      %p119 = por %p117, %p118
      %p120 = scmp.ne.s32.totalorder %s109, %s110
      %p121 = scmp.eq.s32.totalorder %s17, 0
      %p122 = por %p120, %p121
      %p123 = scmp.ne.s32.totalorder %s109, %s110
      %p124 = scmp.eq.s32.totalorder %s18, 1
      %p125 = por %p123, %p124
      %p127 = scmp.ne.s32.totalorder %s110, %s126
      %p128 = scmp.eq.s32.totalorder %s18, 0
      %p129 = por %p127, %p128
      %p130 = scmp.le.s32.totalorder 1, %s12
      %p131 = scmp.lt.s32.totalorder %s12, 3
      %p132 = pnand %p130, %p131
      %p133 = pneg %p132
      // Predicated region
      $region9: #{tpu_custom_call.1} parent=5 // pred_check
        _
      $region10: #{tpu_custom_call.1} parent=5 // pred_check_branch
        %135 = sbr.rel (%p132) target = $region12
      $region11: #{tpu_custom_call.1} parent=5 // pred_region
        %s136 = ssub.s32 %s12, 1
        // Predicated region
        $region13: #{tpu_custom_call.1} parent=11 // pred_check
          %p137 = pneg %p73
        $region14: #{tpu_custom_call.1} parent=11 // pred_check_branch
          %139 = sbr.rel (%p137) target = $region16
        $region15: #{tpu_custom_call.1} parent=11 // pred_region
          _
        $region16: #{tpu_custom_call.1} parent=11 // pred_fallthru
          _
        // Predicated region
        $region17: #{tpu_custom_call.1} parent=11 // pred_check
          %p140 = pneg %p94
        $region18: #{tpu_custom_call.1} parent=11 // pred_check_branch
          %142 = sbr.rel (%p140) target = $region20
        $region19: #{tpu_custom_call.1} parent=11 // pred_region
          _
        $region20: #{tpu_custom_call.1} parent=11 // pred_fallthru
          _
      $region12: #{tpu_custom_call.1} parent=5 // pred_fallthru
        _
      %p143 = scmp.lt.s32.totalorder %s12, 2
      // Predicated region
      $region21: #{tpu_custom_call.1} parent=5 // pred_check
        %p144 = pneg %p143
      $region22: #{tpu_custom_call.1} parent=5 // pred_check_branch
        %146 = sbr.rel (%p144) target = $region24
      $region23: #{tpu_custom_call.1} parent=5 // pred_region
        // Predicated region
        $region25: #{tpu_custom_call.1} parent=23 // pred_check
          %p147 = pneg %p46
        $region26: #{tpu_custom_call.1} parent=23 // pred_check_branch
          %149 = sbr.rel (%p147) target = $region28
        $region27: #{tpu_custom_call.1} parent=23 // pred_region
          %p150 = scmp.lt.s32.totalorder %s19, 1
          %s151 = scalar_select %p150, %s19, 1
          %p152 = scmp.lt.s32.totalorder %s20, 0
          %s153 = scalar_select %p152, %s20, 0
          %s154 = sadd.s32 %s153, %s151
          %s155 = smul.addr %s154, 4
          %s156 = scalar_lea.vmem %s0, %s155
        $region28: #{tpu_custom_call.1} parent=23 // pred_fallthru
          _
      $region24: #{tpu_custom_call.1} parent=5 // pred_fallthru
        _
      %p157 = scmp.le.s32.totalorder 1, %s12
      %p158 = scmp.lt.s32.totalorder %s12, 3
      %p159 = pnand %p157, %p158
      %p160 = pneg %p159
      // Predicated region
      $region29: #{tpu_custom_call.1} parent=5 // pred_check
        _
      $region30: #{tpu_custom_call.1} parent=5 // pred_check_branch
        %162 = sbr.rel (%p159) target = $region32
      $region31: #{tpu_custom_call.1} parent=5 // pred_region
        %s163 = ssub.s32 %s12, 1
        %p164 = scmp.lt.s32.totalorder %s21, 1
        %s165 = scalar_select %p164, %s21, 1
        %p166 = scmp.lt.s32.totalorder %s22, 0
        %s167 = scalar_select %p166, %s22, 0
        %s168 = sadd.s32 %s167, %s165
        %s169 = smul.addr %s168, 4
        %s170 = scalar_lea.vmem %s0, %s169
        %p171 = pneg %p52
        %p172 = pneg %p49
        %p173 = pneg %p73
        %p174 = pneg %p70
        %p175 = pneg %p94
        %p176 = pneg %p91
        %p177 = pneg %p122
        %p178 = pneg %p119
        %s179 = sand.u32 %s109, 1
        %s180 = scalar_lea.sflag [#allocation3], %s179
        %s181 = sand.u32 %s109, 1
        %s182 = smul.addr %s181, 8
        %s183 = scalar_lea.vmem [#allocation2], %s182
        %p184 = scmp.lt.s32.totalorder %s21, 1
        %s185 = scalar_select %p184, %s21, 1
        %p186 = scmp.lt.s32.totalorder %s22, 0
        %s187 = scalar_select %p186, %s22, 0
        %s188 = sadd.s32 %s187, %s185
        %s189 = smul.addr %s188, 4
        %s190 = scalar_lea.vmem %s0, %s189
        %v191 = vld [vmem:[%s1] sm:$0xff]
        %v192 = vld [vmem:[%s2] sm:$0xff]
        %194 = vset.pattern.permute.xlu0 0
        %195 = vperm.xlu0 %194, %v191
        %v196 = vpop.permute.xlu0 %195
        %198 = vset.pattern.permute.xlu0 1
        %199 = vperm.xlu0 %198, %v191
        %v200 = vpop.permute.xlu0 %199
        %202 = vset.pattern.permute.xlu0 2
        %203 = vperm.xlu0 %202, %v191
        %v204 = vpop.permute.xlu0 %203
        %206 = vset.pattern.permute.xlu0 3
        %207 = vperm.xlu0 %206, %v191
        %v208 = vpop.permute.xlu0 %207
        %v210 = vld [vmem:[%s190] sm:$0xf]
        %v211 = vperm.slane %v210, 0
        %v212 = vmul.f32 %v196, %v211
        %v213 = vperm.slane %v210, 1
        %v214 = vmul.f32 %v200, %v213
        %v215 = vadd.f32 %v212, %v214
        %v216 = vperm.slane %v210, 2
        %v217 = vmul.f32 %v204, %v216
        %v218 = vadd.f32 %v215, %v217
        %v219 = vperm.slane %v210, 3
        %v220 = vmul.f32 %v208, %v219
        %v221 = vadd.f32 %v218, %v220
        %223 = vset.pattern.permute.xlu0 0
        %224 = vperm.xlu0 %223, %v192
        %v225 = vpop.permute.xlu0 %224
        %v227 = vadd.f32 %v221, %v225
        %v228 = vadd.f32 %v227, 3.0
        %v229 = vmax.f32 %v228, 0.0
        %v230 = vmin.f32 %v229, 6.0
        %v231 = vmul.f32 %v227, %v230
        %v232 = vmul.f32 %v231, 0.16666667
        %vm233 = vcmask 130048
        %234 = vst.msk [vmem:[%s183] sm:$0xff] %vm233, %v232
        %s235 = sand.u32 %s109, 1
        %s236 = scalar_lea.sflag [#allocation3], %s235
        %s237 = sand.u32 %s109, 1
        %s238 = smul.addr %s237, 8
        %s239 = scalar_lea.vmem [#allocation2], %s238
        // Predicated region
        $region33: #{tpu_custom_call.1} parent=31 // pred_check
          %p240 = pneg %p119
        $region34: #{tpu_custom_call.1} parent=31 // pred_check_branch
          %242 = sbr.rel (%p240) target = $region36
        $region35: #{tpu_custom_call.1} parent=31 // pred_region
          %244 = vsyncadd %s236, 0
          %s245 = sadd.s32 %s22, %s21
          %s246 = smul.addr %s245, 8
          %s247 = scalar_lea.hbm %s3, %s246
          %s249 = sshll.u32 %s239, 4
          %s250 = int_to_ptr.vmem [resolvable:$true] %s249
          %s251 = sshll.u32 %s247, 4
          %s252 = int_to_ptr.hbm [resolvable:$true] %s251
          %254 = dma.vmem_to_hbm [thread:$0]  %s250, 128, %s252, %s236
        $region36: #{tpu_custom_call.1} parent=31 // pred_fallthru
          _
      $region32: #{tpu_custom_call.1} parent=5 // pred_fallthru
        _
      %p255 = scmp.le.s32.totalorder 2, %s12
      // Predicated region
      $region37: #{tpu_custom_call.1} parent=5 // pred_check
        %p256 = pneg %p255
      $region38: #{tpu_custom_call.1} parent=5 // pred_check_branch
        %258 = sbr.rel (%p256) target = $region40
      $region39: #{tpu_custom_call.1} parent=5 // pred_region
        %s259 = ssub.s32 %s12, 2
        // Predicated region
        $region41: #{tpu_custom_call.1} parent=39 // pred_check
          %p260 = pneg %p125
        $region42: #{tpu_custom_call.1} parent=39 // pred_check_branch
          %262 = sbr.rel (%p260) target = $region44
        $region43: #{tpu_custom_call.1} parent=39 // pred_region
          %s263 = sand.u32 %s110, 1
          %s264 = scalar_lea.sflag [#allocation3], %s263
          %s265 = sand.u32 %s110, 1
          %s266 = smul.addr %s265, 8
          %s267 = scalar_lea.vmem [#allocation2], %s266
          %269 = dma.done %s264, 128
        $region44: #{tpu_custom_call.1} parent=39 // pred_fallthru
          _
      $region40: #{tpu_custom_call.1} parent=5 // pred_fallthru
        _
    $region6: #{tpu_custom_call.1} parent=1 // loop_footer
      %s16 = sadd.s32 1, %s12
    $region7: #{tpu_custom_call.1} parent=1 // loop_footer_branch
      %11 = sbr.rel target = $region3
    $region8: #{tpu_custom_call.1} parent=1 // loop_exit
      _
    %270 = vsyncpa [#allocation3], 1
    %s271 = scalar_lea.sflag [#allocation3], 1
    %272 = vsyncpa %s271, 1

</llo_original>
